<compile_context>
chip_gen: v7x
topology: tpu7x:2x2x1
jax: 0.10.0
libtpu: 0.0.40
codegen_flags: <defaults>
</compile_context>

<pallas_src>
import functools

import jax
import jax.numpy as jnp
from jax import lax
from jax.experimental import pallas as pl
from jax.experimental.pallas import tpu as pltpu


def _round_up(a, b):
    return (a + b - 1) // b * b


def _make_kernel(Cinp, Coutp, Lout, Loutp, k, stride, pad, NB, use_res, cdtype):
    # conv1 tap dk reads padded-x lane (stride*t + dk) == phase r=dk%stride, column q=dk//stride + t
    taps1 = [divmod(dk, stride) for dk in range(k)]
    # 1x1 shortcut (stride) reads padded-x lane (stride*t + pad)
    q0, r0 = divmod(pad, stride)

    def kernel(*refs):
        if use_res:
            x_ref, w1_ref, w2_ref, wsc_ref, b1_ref, bc_ref, out_ref = refs
        else:
            x_ref, w1_ref, w2_ref, b1_ref, bc_ref, out_ref = refs
            wsc_ref = None

        # Resident operands: loaded once per grid step, reused for all NB batch rows.
        w1 = [w1_ref[dk] for dk in range(k)]          # k x (Coutp, Cinp)
        w2 = [w2_ref[dk] for dk in range(k)]          # k x (Coutp, Coutp)
        wsc = wsc_ref[...] if use_res else None       # (Coutp, Cinp)
        b1 = b1_ref[...]                               # (Coutp, 1) f32
        bc = bc_ref[...]                               # (Coutp, 1) f32

        need_mask = Loutp > Lout
        if need_mask:
            lane = lax.broadcasted_iota(jnp.int32, (Coutp, Loutp), 1)
            keep = lane < Lout

        def row(i, carry):
            # ---- conv1 (stride folded into phase layout) + BN1 + ReLU -----------------
            h1 = None
            for dk, (q, r) in enumerate(taps1):
                xt = x_ref[i, pl.ds(r * Cinp, Cinp), pl.ds(q, Loutp)]   # (Cinp, Loutp)
                p = jnp.dot(w1[dk], xt, preferred_element_type=jnp.float32)
                h1 = p if h1 is None else h1 + p
            h1 = jnp.maximum(h1 + b1, 0.0)                              # (Coutp, Loutp) f32
            if need_mask:               # keep conv2's 'same' zero padding actually zero
                h1 = jnp.where(keep, h1, 0.0)

            # ---- conv2 (stride 1, 'same') + BN2: k accumulated matmuls ----------------
            if pad > 0:
                z = jnp.zeros((Coutp, pad), jnp.float32)
                h1p = jnp.concatenate([z, h1, z], axis=1)               # (Coutp, Loutp+2p)
            else:
                h1p = h1
            h1p = h1p.astype(cdtype)
            acc = None
            for dk in range(k):
                p = jnp.dot(w2[dk], h1p[:, dk:dk + Loutp],
                            preferred_element_type=jnp.float32)
                acc = p if acc is None else acc + p

            # ---- shortcut: 1x1 conv (stride) + BNsc -----------------------------------
            if use_res:
                xc = x_ref[i, pl.ds(r0 * Cinp, Cinp), pl.ds(q0, Loutp)]
                acc = acc + jnp.dot(wsc, xc, preferred_element_type=jnp.float32)

            # ---- tanh (dropout == identity in eval) -----------------------------------
            out_ref[i] = jnp.tanh(acc + bc)
            return carry

        lax.fori_loop(0, NB, row, 0)

    return kernel


def residual_block_pallas(x, params, *, kernel_size, stride, use_res=True,
                          compute_dtype=jnp.float32, batch_block=8,
                          vmem_limit_bytes=48 * 1024 * 1024):
    """x: (N, C_in, L) float32 (PyTorch NCL). Returns (N, C_out, L_out) float32."""
    N, Cin, L = x.shape
    k, s = kernel_size, stride
    assert k % 2 == 1, "only odd kernel_size supported (shortcut length alignment)"
    pad = k // 2
    Cout = params["w1"].shape[0]
    Lout = (L + 2 * pad - k) // s + 1

    f32 = jnp.float32
    Cinp = _round_up(Cin, 8)          # sublane-aligned channels
    Coutp = _round_up(Cout, 8)
    Loutp = _round_up(Lout, 128)      # lane-dense output
    qmax = (k - 1) // s
    Lph = Loutp + qmax                # per-phase lane extent read by the kernel
    NB = max(1, min(batch_block, N))  # batch rows per grid step
    Np = _round_up(N, NB)

    # ----- input: zero-pad (conv 'same' pad + alignment) and split into `stride` phases.
    # Phase r, column m  <->  padded-x lane (s*m + r); every conv tap becomes a contiguous
    # lane slice in-kernel (no strided loads, ~1x input HBM traffic).
    x = x.astype(f32)
    right = s * Lph - pad - L
    assert right >= 0
    xp = jnp.pad(x, ((0, Np - N), (0, Cinp - Cin), (pad, right)))        # (Np,Cinp,s*Lph)
    xph = xp.reshape(Np, Cinp, Lph, s).transpose(0, 3, 1, 2).reshape(Np, s * Cinp, Lph)
    xph = xph.astype(compute_dtype)

    # ----- weights: pad, fold BN scale into the conv weight, tap-major (k, Cout, Cin).
    def fold_bn(bn, eps=1e-5):
        gamma, beta, mean, var = [a.astype(f32) for a in bn]
        scale = gamma / jnp.sqrt(var + eps)
        bias = beta - mean * scale
        return jnp.pad(scale, (0, Coutp - Cout)), jnp.pad(bias, (0, Coutp - Cout))

    def prep_w(w, scale, cin_p):
        wt = jnp.transpose(w.astype(f32), (2, 0, 1))                     # (k, Cout, Cin)
        wt = jnp.pad(wt, ((0, 0), (0, Coutp - w.shape[0]), (0, cin_p - w.shape[1])))
        return (wt * scale[None, :, None]).astype(compute_dtype)

    s1, b1 = fold_bn(params["bn1"])
    s2, b2 = fold_bn(params["bn2"])
    w1f = prep_w(params["w1"], s1, Cinp)                                 # (k, Coutp, Cinp)
    w2f = prep_w(params["w2"], s2, Coutp)                                # (k, Coutp, Coutp)
    if use_res:
        ssc, bsc = fold_bn(params["bnsc"])
        wscf = prep_w(params["wsc"], ssc, Cinp)[0]                       # (Coutp, Cinp)
        bc = b2 + bsc
    else:
        wscf = None
        bc = b2
    b1 = b1.reshape(Coutp, 1)
    bc = bc.reshape(Coutp, 1)

    def resident(shape):
        return pl.BlockSpec(shape, lambda n: (0,) * len(shape))

    in_specs = [pl.BlockSpec((NB, s * Cinp, Lph), lambda n: (n, 0, 0)),
                resident((k, Coutp, Cinp)),
                resident((k, Coutp, Coutp))]
    args = [xph, w1f, w2f]
    if use_res:
        in_specs.append(resident((Coutp, Cinp)))
        args.append(wscf)
    in_specs += [resident((Coutp, 1)), resident((Coutp, 1))]
    args += [b1, bc]

    kernel = _make_kernel(Cinp, Coutp, Lout, Loutp, k, s, pad, NB, use_res, compute_dtype)
    out = pl.pallas_call(
        kernel,
        out_shape=jax.ShapeDtypeStruct((Np, Coutp, Loutp), f32),
        grid=(Np // NB,),
        in_specs=in_specs,
        out_specs=pl.BlockSpec((NB, Coutp, Loutp), lambda n: (n, 0, 0)),
        compiler_params=pltpu.CompilerParams(
            dimension_semantics=("parallel",),   # megacore sharding on multi-TC chips
            vmem_limit_bytes=vmem_limit_bytes,   # <=48 MiB: safe on v7x (64 MiB physical)
        ),
    )(*args)

    return out[:N, :Cout, :Lout]                                          # (N, Cout, Lout)


# ---------------------------- pure-JAX reference ------------------------------
def _conv1d(x, w, stride, pad):
    return lax.conv_general_dilated(x, w, window_strides=(stride,),
                                    padding=[(pad, pad)],
                                    dimension_numbers=("NCH", "OIH", "NCH"))


def _bn_ref(x, gamma, beta, mean, var, eps=1e-5):
    return ((x - mean[None, :, None]) / jnp.sqrt(var[None, :, None] + eps)
            * gamma[None, :, None] + beta[None, :, None])


def residual_block_ref(x, params, *, kernel_size, stride, use_res=True):
    pad = kernel_size // 2
    h = _conv1d(x, params["w1"], stride, pad)
    h = jnp.maximum(_bn_ref(h, *params["bn1"]), 0.0)
    h = _conv1d(h, params["w2"], 1, pad)
    out = _bn_ref(h, *params["bn2"])
    if use_res:
        sc = _conv1d(x, params["wsc"], stride, 0)
        out = out + _bn_ref(sc, *params["bnsc"])
    return jnp.tanh(out)


# ------------------------------------ main ------------------------------------
if __name__ == "__main__":
    def make_params(key, Cin, Cout, k, use_res):
        keys = jax.random.split(key, 10)

        def bn(kg, kb, c):
            gamma = 1.0 + 0.1 * jax.random.normal(kg, (c,), jnp.float32)
            beta = 0.1 * jax.random.normal(kb, (c,), jnp.float32)
            mean = 0.05 * jnp.arange(c, dtype=jnp.float32)
            var = 1.0 + 0.01 * jnp.arange(c, dtype=jnp.float32)
            return (gamma, beta, mean, var)

        p = {"w1": 0.3 * jax.random.normal(keys[1], (Cout, Cin, k), jnp.float32),
             "w2": 0.3 * jax.random.normal(keys[2], (Cout, Cout, k), jnp.float32),
             "bn1": bn(keys[4], keys[5], Cout),
             "bn2": bn(keys[6], keys[7], Cout)}
        if use_res:
            p["wsc"] = 0.3 * jax.random.normal(keys[3], (Cout, Cin, 1), jnp.float32)
            p["bnsc"] = bn(keys[8], keys[9], Cout)
        return p

    k1, k2, k3, k4 = jax.random.split(jax.random.PRNGKey(0), 4)

    # ---- config A: stride 2, residual shortcut (f32 and bf16 compute paths) ----
    N, Cin, Cout, L, ks, st = 2, 4, 8, 16, 3, 2
    x = jax.random.normal(k1, (N, Cin, L), jnp.float32)
    params = make_params(k2, Cin, Cout, ks, True)
    ref = residual_block_ref(x, params, kernel_size=ks, stride=st, use_res=True)

    fwd32 = jax.jit(functools.partial(residual_block_pallas, kernel_size=ks, stride=st,
                                      use_res=True, compute_dtype=jnp.float32))
    out32 = jax.block_until_ready(fwd32(x, params))
    assert out32.shape == ref.shape == (N, Cout, 8)
    assert jnp.allclose(out32, ref, atol=5e-4, rtol=5e-4), "f32 path mismatch vs reference"

    fwd16 = jax.jit(functools.partial(residual_block_pallas, kernel_size=ks, stride=st,
                                      use_res=True, compute_dtype=jnp.bfloat16))
    out16 = jax.block_until_ready(fwd16(x, params))
    assert jnp.allclose(out16, ref, atol=5e-2, rtol=5e-2), "bf16 path mismatch vs reference"

    # ---- config B: stride 1, no shortcut, unaligned channel / length sizes ----
    N, Cin, Cout, L, ks, st = 3, 3, 6, 19, 3, 1
    x = jax.random.normal(k3, (N, Cin, L), jnp.float32)
    params = make_params(k4, Cin, Cout, ks, False)
    ref = residual_block_ref(x, params, kernel_size=ks, stride=st, use_res=False)
    fwdB = jax.jit(functools.partial(residual_block_pallas, kernel_size=ks, stride=st,
                                     use_res=False, compute_dtype=jnp.float32))
    outB = jax.block_until_ready(fwdB(x, params))
    assert outB.shape == ref.shape == (N, Cout, 19)
    assert jnp.allclose(outB, ref, atol=5e-4, rtol=5e-4), "no-res path mismatch vs reference"

    print("KERNEL_OK")
</pallas_src>

<mosaic_0001>
module attributes {stable_mosaic.version = 11 : i64} {
  func.func @kernel(%arg0: i32, %arg1: memref<2x16x129xf32, #tpu.memory_space<vmem>>, %arg2: memref<3x8x8xf32, #tpu.memory_space<vmem>>, %arg3: memref<3x8x8xf32, #tpu.memory_space<vmem>>, %arg4: memref<8x8xf32, #tpu.memory_space<vmem>>, %arg5: memref<8x1xf32, #tpu.memory_space<vmem>>, %arg6: memref<8x1xf32, #tpu.memory_space<vmem>>, %arg7: memref<2x8x128xf32, #tpu.memory_space<vmem>>) attributes {dimension_semantics = [#tpu.dimension_semantics<parallel>], iteration_bounds = array<i64: 1>, scalar_prefetch = 0 : i64, scratch_operands = 0 : i64, tpu.core_type = #tpu.core_type<tc>, window_params = [{transform_indices = @transform_0, window_bounds = array<i64: 2, 16, 129>}, {pipeline_mode = #tpu.pipeline_mode<synchronous>, transform_indices = @transform_1, window_bounds = array<i64: 3, 8, 8>}, {pipeline_mode = #tpu.pipeline_mode<synchronous>, transform_indices = @transform_2, window_bounds = array<i64: 3, 8, 8>}, {pipeline_mode = #tpu.pipeline_mode<synchronous>, transform_indices = @transform_3, window_bounds = array<i64: 8, 8>}, {pipeline_mode = #tpu.pipeline_mode<synchronous>, transform_indices = @transform_4, window_bounds = array<i64: 8, 1>}, {pipeline_mode = #tpu.pipeline_mode<synchronous>, transform_indices = @transform_5, window_bounds = array<i64: 8, 1>}, {transform_indices = @transform_6, window_bounds = array<i64: 2, 8, 128>}]} {
    %c0 = arith.constant 0 : index
    %c0_0 = arith.constant 0 : index
    %c0_1 = arith.constant 0 : index
    %0 = vector.load %arg2[%c0, %c0_0, %c0_1] : memref<3x8x8xf32, #tpu.memory_space<vmem>>, vector<1x8x8xf32>
    %1 = vector.shape_cast %0 : vector<1x8x8xf32> to vector<8x8xf32>
    %c1 = arith.constant 1 : index
    %c0_2 = arith.constant 0 : index
    %c0_3 = arith.constant 0 : index
    %2 = vector.load %arg2[%c1, %c0_2, %c0_3] : memref<3x8x8xf32, #tpu.memory_space<vmem>>, vector<1x8x8xf32>
    %3 = vector.shape_cast %2 : vector<1x8x8xf32> to vector<8x8xf32>
    %c2 = arith.constant 2 : index
    %c0_4 = arith.constant 0 : index
    %c0_5 = arith.constant 0 : index
    %4 = vector.load %arg2[%c2, %c0_4, %c0_5] : memref<3x8x8xf32, #tpu.memory_space<vmem>>, vector<1x8x8xf32>
    %5 = vector.shape_cast %4 : vector<1x8x8xf32> to vector<8x8xf32>
    %c0_6 = arith.constant 0 : index
    %c0_7 = arith.constant 0 : index
    %c0_8 = arith.constant 0 : index
    %6 = vector.load %arg3[%c0_6, %c0_7, %c0_8] : memref<3x8x8xf32, #tpu.memory_space<vmem>>, vector<1x8x8xf32>
    %7 = vector.shape_cast %6 : vector<1x8x8xf32> to vector<8x8xf32>
    %c1_9 = arith.constant 1 : index
    %c0_10 = arith.constant 0 : index
    %c0_11 = arith.constant 0 : index
    %8 = vector.load %arg3[%c1_9, %c0_10, %c0_11] : memref<3x8x8xf32, #tpu.memory_space<vmem>>, vector<1x8x8xf32>
    %9 = vector.shape_cast %8 : vector<1x8x8xf32> to vector<8x8xf32>
    %c2_12 = arith.constant 2 : index
    %c0_13 = arith.constant 0 : index
    %c0_14 = arith.constant 0 : index
    %10 = vector.load %arg3[%c2_12, %c0_13, %c0_14] : memref<3x8x8xf32, #tpu.memory_space<vmem>>, vector<1x8x8xf32>
    %11 = vector.shape_cast %10 : vector<1x8x8xf32> to vector<8x8xf32>
    %c0_15 = arith.constant 0 : index
    %c0_16 = arith.constant 0 : index
    %12 = vector.load %arg4[%c0_15, %c0_16] : memref<8x8xf32, #tpu.memory_space<vmem>>, vector<8x8xf32>
    %c0_17 = arith.constant 0 : index
    %c0_18 = arith.constant 0 : index
    %13 = vector.load %arg5[%c0_17, %c0_18] : memref<8x1xf32, #tpu.memory_space<vmem>>, vector<8x1xf32>
    %c0_19 = arith.constant 0 : index
    %c0_20 = arith.constant 0 : index
    %14 = vector.load %arg6[%c0_19, %c0_20] : memref<8x1xf32, #tpu.memory_space<vmem>>, vector<8x1xf32>
    %15 = tpu.iota {dimensions = array<i32: 1>} : vector<8x128xi32>
    %c8_i32 = arith.constant 8 : i32
    %16 = vector.broadcast %c8_i32 : i32 to vector<8x128xi32>
    %17 = arith.cmpi slt, %15, %16 : vector<8x128xi32>
    %c0_i32 = arith.constant 0 : i32
    %c2_i32 = arith.constant 2 : i32
    %18 = arith.addi %c0_i32, %c2_i32 : i32
    %c1_i32 = arith.constant 1 : i32
    scf.for %arg8 = %c0_i32 to %18 step %c1_i32  : i32 {
      %19 = arith.index_cast %arg8 : i32 to index
      %c0_22 = arith.constant 0 : index
      %c0_23 = arith.constant 0 : index
      %20 = vector.load %arg1[%19, %c0_22, %c0_23] : memref<2x16x129xf32, #tpu.memory_space<vmem>>, vector<1x8x128xf32>
      %21 = vector.shape_cast %20 : vector<1x8x128xf32> to vector<8x128xf32>
      %cst = arith.constant dense<0.000000e+00> : vector<8x128xf32>
      %22 = tpu.matmul %1, %21, %cst {dimension_numbers = #tpu.dot_dimension_numbers<[1], [0], [0], [1], [0, 0, 1, 1], [], []>} : vector<8x8xf32>, vector<8x128xf32>, vector<8x128xf32> -> vector<8x128xf32>
      %23 = arith.index_cast %arg8 : i32 to index
      %c8 = arith.constant 8 : index
      %c0_24 = arith.constant 0 : index
      %24 = vector.load %arg1[%23, %c8, %c0_24] : memref<2x16x129xf32, #tpu.memory_space<vmem>>, vector<1x8x128xf32>
      %25 = vector.shape_cast %24 : vector<1x8x128xf32> to vector<8x128xf32>
      %cst_25 = arith.constant dense<0.000000e+00> : vector<8x128xf32>
      %26 = tpu.matmul %3, %25, %cst_25 {dimension_numbers = #tpu.dot_dimension_numbers<[1], [0], [0], [1], [0, 0, 1, 1], [], []>} : vector<8x8xf32>, vector<8x128xf32>, vector<8x128xf32> -> vector<8x128xf32>
      %27 = arith.addf %22, %26 : vector<8x128xf32>
      %28 = arith.index_cast %arg8 : i32 to index
      %c0_26 = arith.constant 0 : index
      %c1_27 = arith.constant 1 : index
      %29 = vector.load %arg1[%28, %c0_26, %c1_27] : memref<2x16x129xf32, #tpu.memory_space<vmem>>, vector<1x8x128xf32>
      %30 = vector.shape_cast %29 : vector<1x8x128xf32> to vector<8x128xf32>
      %cst_28 = arith.constant dense<0.000000e+00> : vector<8x128xf32>
      %31 = tpu.matmul %5, %30, %cst_28 {dimension_numbers = #tpu.dot_dimension_numbers<[1], [0], [0], [1], [0, 0, 1, 1], [], []>} : vector<8x8xf32>, vector<8x128xf32>, vector<8x128xf32> -> vector<8x128xf32>
      %32 = arith.addf %27, %31 : vector<8x128xf32>
      %33 = vector.broadcast %13 : vector<8x1xf32> to vector<8x128xf32>
      %34 = arith.addf %32, %33 : vector<8x128xf32>
      %cst_29 = arith.constant 0.000000e+00 : f32
      %35 = vector.broadcast %cst_29 : f32 to vector<8x128xf32>
      %36 = arith.maximumf %34, %35 : vector<8x128xf32>
      %cst_30 = arith.constant 0.000000e+00 : f32
      %37 = vector.broadcast %cst_30 : f32 to vector<8x128xf32>
      %38 = arith.select %17, %36, %37 : vector<8x128xi1>, vector<8x128xf32>
      %cst_31 = arith.constant 0.000000e+00 : f32
      %39 = vector.broadcast %cst_31 : f32 to vector<8x1xf32>
      %40 = tpu.concatenate %39, %38, %39 in 1 : vector<8x1xf32>, vector<8x128xf32>, vector<8x1xf32> -> vector<8x130xf32>
      %41 = vector.extract_strided_slice %40 {offsets = [0, 0], sizes = [8, 128], strides = [1, 1]} : vector<8x130xf32> to vector<8x128xf32>
      %cst_32 = arith.constant dense<0.000000e+00> : vector<8x128xf32>
      %42 = tpu.matmul %7, %41, %cst_32 {dimension_numbers = #tpu.dot_dimension_numbers<[1], [0], [0], [1], [0, 0, 1, 1], [], []>} : vector<8x8xf32>, vector<8x128xf32>, vector<8x128xf32> -> vector<8x128xf32>
      %43 = vector.extract_strided_slice %40 {offsets = [0, 1], sizes = [8, 128], strides = [1, 1]} : vector<8x130xf32> to vector<8x128xf32>
      %cst_33 = arith.constant dense<0.000000e+00> : vector<8x128xf32>
      %44 = tpu.matmul %9, %43, %cst_33 {dimension_numbers = #tpu.dot_dimension_numbers<[1], [0], [0], [1], [0, 0, 1, 1], [], []>} : vector<8x8xf32>, vector<8x128xf32>, vector<8x128xf32> -> vector<8x128xf32>
      %45 = arith.addf %42, %44 : vector<8x128xf32>
      %46 = vector.extract_strided_slice %40 {offsets = [0, 2], sizes = [8, 128], strides = [1, 1]} : vector<8x130xf32> to vector<8x128xf32>
      %cst_34 = arith.constant dense<0.000000e+00> : vector<8x128xf32>
      %47 = tpu.matmul %11, %46, %cst_34 {dimension_numbers = #tpu.dot_dimension_numbers<[1], [0], [0], [1], [0, 0, 1, 1], [], []>} : vector<8x8xf32>, vector<8x128xf32>, vector<8x128xf32> -> vector<8x128xf32>
      %48 = arith.addf %45, %47 : vector<8x128xf32>
      %49 = arith.index_cast %arg8 : i32 to index
      %c8_35 = arith.constant 8 : index
      %c0_36 = arith.constant 0 : index
      %50 = vector.load %arg1[%49, %c8_35, %c0_36] : memref<2x16x129xf32, #tpu.memory_space<vmem>>, vector<1x8x128xf32>
      %51 = vector.shape_cast %50 : vector<1x8x128xf32> to vector<8x128xf32>
      %cst_37 = arith.constant dense<0.000000e+00> : vector<8x128xf32>
      %52 = tpu.matmul %12, %51, %cst_37 {dimension_numbers = #tpu.dot_dimension_numbers<[1], [0], [0], [1], [0, 0, 1, 1], [], []>} : vector<8x8xf32>, vector<8x128xf32>, vector<8x128xf32> -> vector<8x128xf32>
      %53 = arith.addf %48, %52 : vector<8x128xf32>
      %54 = vector.broadcast %14 : vector<8x1xf32> to vector<8x128xf32>
      %55 = arith.addf %53, %54 : vector<8x128xf32>
      %56 = math.tanh %55 : vector<8x128xf32>
      %57 = arith.index_cast %arg8 : i32 to index
      %c0_38 = arith.constant 0 : index
      %c0_39 = arith.constant 0 : index
      %58 = vector.load %arg7[%57, %c0_38, %c0_39] : memref<2x8x128xf32, #tpu.memory_space<vmem>>, vector<1x8x128xf32>
      %59 = vector.shape_cast %58 : vector<1x8x128xf32> to vector<8x128xf32>
      %60 = vector.shape_cast %56 : vector<8x128xf32> to vector<1x8x128xf32>
      tpu.vector_store %arg7[%57, %c0_38, %c0_39], %60 {strides = array<i32>} : memref<2x8x128xf32, #tpu.memory_space<vmem>>, vector<1x8x128xf32>,
    }
    %c2_i32_21 = arith.constant 2 : i32
    return
  }
  func.func @transform_0(%arg0: i32) -> (i32, i32, i32) {
    %c0_i32 = arith.constant 0 : i32
    %c0_i32_0 = arith.constant 0 : i32
    %c0_i32_1 = arith.constant 0 : i32
    return %arg0, %c0_i32, %c0_i32_0 : i32, i32, i32
  }
  func.func @transform_1(%arg0: i32) -> (i32, i32, i32) {
    %c0_i32 = arith.constant 0 : i32
    %c0_i32_0 = arith.constant 0 : i32
    %c0_i32_1 = arith.constant 0 : i32
    %c0_i32_2 = arith.constant 0 : i32
    return %c0_i32, %c0_i32_0, %c0_i32_1 : i32, i32, i32
  }
  func.func @transform_2(%arg0: i32) -> (i32, i32, i32) {
    %c0_i32 = arith.constant 0 : i32
    %c0_i32_0 = arith.constant 0 : i32
    %c0_i32_1 = arith.constant 0 : i32
    %c0_i32_2 = arith.constant 0 : i32
    return %c0_i32, %c0_i32_0, %c0_i32_1 : i32, i32, i32
  }
  func.func @transform_3(%arg0: i32) -> (i32, i32) {
    %c0_i32 = arith.constant 0 : i32
    %c0_i32_0 = arith.constant 0 : i32
    %c0_i32_1 = arith.constant 0 : i32
    return %c0_i32, %c0_i32_0 : i32, i32
  }
  func.func @transform_4(%arg0: i32) -> (i32, i32) {
    %c0_i32 = arith.constant 0 : i32
    %c0_i32_0 = arith.constant 0 : i32
    %c0_i32_1 = arith.constant 0 : i32
    return %c0_i32, %c0_i32_0 : i32, i32
  }
  func.func @transform_5(%arg0: i32) -> (i32, i32) {
    %c0_i32 = arith.constant 0 : i32
    %c0_i32_0 = arith.constant 0 : i32
    %c0_i32_1 = arith.constant 0 : i32
    return %c0_i32, %c0_i32_0 : i32, i32
  }
  func.func @transform_6(%arg0: i32) -> (i32, i32, i32) {
    %c0_i32 = arith.constant 0 : i32
    %c0_i32_0 = arith.constant 0 : i32
    %c0_i32_1 = arith.constant 0 : i32
    return %arg0, %c0_i32, %c0_i32_0 : i32, i32, i32
  }
}

</mosaic_0001>

<llo_original>
// kernel: residual_block_pallas.1
$region0: #{residual_block_pallas.1}
  #allocation0 [shape = 'u32[]', space=smem, size = 0x4, offset = 0x4, fixed_abs, tag = 'smem constant byte address 0x4 - core index']
  #allocation1 [shape = 'u32[144,128]{1,0:T(1,128)}', space=vmem, size = 0x12000, scoped, tag = 'internal scratch']
  %s0 = inlined_call_operand.vmem [shape: f32[2,16,129], index: 0, kind: input, shape index: {}]
  %s1 = inlined_call_operand.vmem [shape: f32[3,8,8], index: 1, kind: input, shape index: {}]
  %s2 = inlined_call_operand.vmem [shape: f32[3,8,8], index: 2, kind: input, shape index: {}]
  %s3 = inlined_call_operand.vmem [shape: f32[8,8], index: 3, kind: input, shape index: {}]
  %s4 = inlined_call_operand.vmem [shape: f32[8,1], index: 4, kind: input, shape index: {}]
  %s5 = inlined_call_operand.vmem [shape: f32[8,1], index: 5, kind: input, shape index: {}]
  %s6 = inlined_call_operand.hbm [shape: f32[2,8,128], index: 6, kind: output, shape index: {}]
  %s7 = sld [smem:[#allocation0]]
  $region41: #{residual_block_pallas.1} parent=0
    _
  %s9 = ssub.s32 1, %s7
  %s10 = scalar_select 0, %s9, %s7
  $region1: #{residual_block_pallas.1} parent=0
    #allocation2 [shape = 'u8[8192]{0}', space=vmem, size = 0x2000, scoped, tag = 'output window, operand 0, single buffered']
    #allocation3 [shape = 's32[1]{0}', space=sflag, size = 0x4, scoped, tag = 'scoped memory for residual_block_pallas.1']
    %11 = vsyncpa [#allocation3], 0
    // Predicated region
    $region2: #{residual_block_pallas.1} parent=1 // pred_check
      _
    $region3: #{residual_block_pallas.1} parent=1 // pred_check_branch
      %13 = sbr.rel (0) target = $region5
    $region4: #{residual_block_pallas.1} parent=1 // pred_region
      _
    $region5: #{residual_block_pallas.1} parent=1 // pred_fallthru
      _
    // Predicated region
    $region6: #{residual_block_pallas.1} parent=1 // pred_check
      _
    $region7: #{residual_block_pallas.1} parent=1 // pred_check_branch
      %15 = sbr.rel (0) target = $region9
    $region8: #{residual_block_pallas.1} parent=1 // pred_region
      _
    $region9: #{residual_block_pallas.1} parent=1 // pred_fallthru
      _
    // Predicated region
    $region10: #{residual_block_pallas.1} parent=1 // pred_check
      _
    $region11: #{residual_block_pallas.1} parent=1 // pred_check_branch
      %17 = sbr.rel (0) target = $region13
    $region12: #{residual_block_pallas.1} parent=1 // pred_region
      _
    $region13: #{residual_block_pallas.1} parent=1 // pred_fallthru
      _
    // Predicated region
    $region14: #{residual_block_pallas.1} parent=1 // pred_check
      _
    $region15: #{residual_block_pallas.1} parent=1 // pred_check_branch
      %19 = sbr.rel (0) target = $region17
    $region16: #{residual_block_pallas.1} parent=1 // pred_region
      _
    $region17: #{residual_block_pallas.1} parent=1 // pred_fallthru
      _
    // Predicated region
    $region18: #{residual_block_pallas.1} parent=1 // pred_check
      _
    $region19: #{residual_block_pallas.1} parent=1 // pred_check_branch
      %21 = sbr.rel (0) target = $region21
    $region20: #{residual_block_pallas.1} parent=1 // pred_region
      _
    $region21: #{residual_block_pallas.1} parent=1 // pred_fallthru
      _
    // Predicated region
    $region22: #{residual_block_pallas.1} parent=1 // pred_check
      _
    $region23: #{residual_block_pallas.1} parent=1 // pred_check_branch
      %23 = sbr.rel (0) target = $region25
    $region24: #{residual_block_pallas.1} parent=1 // pred_region
      _
    $region25: #{residual_block_pallas.1} parent=1 // pred_fallthru
      _
    %v24 = vld [vmem:[%s1] sm:$0xff]
    %s25 = scalar_lea.vmem %s1, 8
    %v26 = vld [vmem:[%s25] sm:$0xff]
    %s27 = scalar_lea.vmem %s1, 16
    %v28 = vld [vmem:[%s27] sm:$0xff]
    %v29 = vld [vmem:[%s2] sm:$0xff]
    %s30 = scalar_lea.vmem %s2, 8
    %v31 = vld [vmem:[%s30] sm:$0xff]
    %s32 = scalar_lea.vmem %s2, 16
    %v33 = vld [vmem:[%s32] sm:$0xff]
    %v34 = vld [vmem:[%s3] sm:$0xff]
    %v35 = vld [vmem:[%s4] sm:$0xff]
    %v36 = vld [vmem:[%s5] sm:$0xff]
    %v37 = vlaneseq
    %v38 = vand.u32 %v37, 127
    %vm39 = vcmp.lt.s32.totalorder %v38, 8
    loop: start=0, step=1, limit=2
    $region26: #{residual_block_pallas.1} parent=1 // loop_pre_header
      _
    $region27: #{residual_block_pallas.1} parent=1 // loop_header
      %s41 = sphi 0, %s45
      %p42 = scmp.ge.s32.totalorder %s41, 2
    $region28: #{residual_block_pallas.1} parent=1 // loop_header_branch
      %44 = sbr.rel (%p42) target = $region32
    $region29: #{residual_block_pallas.1} parent=1 // loop_body
      %s46 = smul.u32 %s41, 4
      %s47 = smul.addr %s46, 8
      %s48 = scalar_lea.vmem %s0, %s47
      %v49 = vld [vmem:[%s48] sm:$0xff]
      %v50 = vld [vmem:[%s48 + $0x10] sm:$0xff]
      %vm51 = vcmask 64512
      %v53 = vsel %vm51, %v26, 0
      %55 = vmatprep.subr.mxu0 0.0
      %56 = vmatpush1.msra.mxu0 %v50
      %57 = vmatprep.subr.mxu0 0.0
      %58 = vmatpush1.msra.mxu0 0.0
      %59 = vmatprep.subr.mxu0 0.0
      %60 = vmatpush1.msra.mxu0 0.0
      %61 = vmatprep.subr.mxu0 0.0
      %62 = vmatpush1.msra.mxu0 0.0
      %63 = vmatprep.subr.mxu0 0.0
      %64 = vmatpush1.msra.mxu0 0.0
      %65 = vmatprep.subr.mxu0 0.0
      %66 = vmatpush1.msra.mxu0 0.0
      %67 = vmatprep.subr.mxu0 0.0
      %68 = vmatpush1.msra.mxu0 0.0
      %69 = vmatprep.subr.mxu0 0.0
      %70 = vmatpush1.msra.mxu0 0.0
      %71 = vmatprep.subr.mxu0 0.0
      %72 = vmatpush1.msra.mxu0 0.0
      %73 = vmatprep.subr.mxu0 0.0
      %74 = vmatpush1.msra.mxu0 0.0
      %75 = vmatprep.subr.mxu0 0.0
      %76 = vmatpush1.msra.mxu0 0.0
      %77 = vmatprep.subr.mxu0 0.0
      %78 = vmatpush1.msra.mxu0 0.0
      %79 = vmatprep.subr.mxu0 0.0
      %80 = vmatpush1.msra.mxu0 0.0
      %81 = vmatprep.subr.mxu0 0.0
      %82 = vmatpush1.msra.mxu0 0.0
      %83 = vmatprep.subr.mxu0 0.0
      %84 = vmatpush1.msra.mxu0 0.0
      %85 = vmatprep.subr.mxu0 0.0
      %86 = vmatpush1.msra.mxu0 0.0
      %87 = vmatprep.subr.mxu0 0.0
      %88 = vmatpush1.msra.mxu0 0.0
      %89 = vmatprep.subr.mxu0 0.0
      %90 = vmatpush1.msra.mxu0 0.0
      %91 = vmatprep.subr.mxu0 0.0
      %92 = vmatpush1.msra.mxu0 0.0
      %93 = vmatprep.subr.mxu0 0.0
      %94 = vmatpush1.msra.mxu0 0.0
      %95 = vmatprep.subr.mxu0 0.0
      %96 = vmatpush1.msra.mxu0 0.0
      %97 = vmatprep.subr.mxu0 0.0
      %98 = vmatpush1.msra.mxu0 0.0
      %99 = vmatprep.subr.mxu0 0.0
      %100 = vmatpush1.msra.mxu0 0.0
      %101 = vmatprep.subr.mxu0 0.0
      %102 = vmatpush1.msra.mxu0 0.0
      %103 = vmatprep.subr.mxu0 0.0
      %104 = vmatpush1.msra.mxu0 0.0
      %105 = vmatprep.subr.mxu0 0.0
      %106 = vmatpush1.msra.mxu0 0.0
      %107 = vmatprep.subr.mxu0 0.0
      %108 = vmatpush1.msra.mxu0 0.0
      %109 = vmatprep.subr.mxu0 0.0
      %110 = vmatpush1.msra.mxu0 0.0
      %111 = vmatprep.subr.mxu0 0.0
      %112 = vmatpush1.msra.mxu0 0.0
      %113 = vmatprep.subr.mxu0 0.0
      %114 = vmatpush1.msra.mxu0 0.0
      %115 = vmatprep.subr.mxu0 0.0
      %116 = vmatpush1.msra.mxu0 0.0
      %117 = vmatprep.subr.mxu0 0.0
      %118 = vmatpush1.msra.mxu0 0.0
      %119 = vmatprep.mubr.f32.mxu0 0.0
      %120 = vmatmul.mubr.f32.gmra.mrb[0].mxu0 %v53
      %v121 = vpop.f32.mrb[0].mxu0
      %v122 = vadd.f32 0.0, %v121
      %v123 = vpop.f32.mrb[0].mxu0
      %124 = vdwg.mxu0
      %v126 = vsel %vm51, %v24, 0
      %128 = vmatprep.subr.mxu0 0.0
      %129 = vmatpush1.msra.mxu0 %v49
      %130 = vmatprep.subr.mxu0 0.0
      %131 = vmatpush1.msra.mxu0 0.0
      %132 = vmatprep.subr.mxu0 0.0
      %133 = vmatpush1.msra.mxu0 0.0
      %134 = vmatprep.subr.mxu0 0.0
      %135 = vmatpush1.msra.mxu0 0.0
      %136 = vmatprep.subr.mxu0 0.0
      %137 = vmatpush1.msra.mxu0 0.0
      %138 = vmatprep.subr.mxu0 0.0
      %139 = vmatpush1.msra.mxu0 0.0
      %140 = vmatprep.subr.mxu0 0.0
      %141 = vmatpush1.msra.mxu0 0.0
      %142 = vmatprep.subr.mxu0 0.0
      %143 = vmatpush1.msra.mxu0 0.0
      %144 = vmatprep.subr.mxu0 0.0
      %145 = vmatpush1.msra.mxu0 0.0
      %146 = vmatprep.subr.mxu0 0.0
      %147 = vmatpush1.msra.mxu0 0.0
      %148 = vmatprep.subr.mxu0 0.0
      %149 = vmatpush1.msra.mxu0 0.0
      %150 = vmatprep.subr.mxu0 0.0
      %151 = vmatpush1.msra.mxu0 0.0
      %152 = vmatprep.subr.mxu0 0.0
      %153 = vmatpush1.msra.mxu0 0.0
      %154 = vmatprep.subr.mxu0 0.0
      %155 = vmatpush1.msra.mxu0 0.0
      %156 = vmatprep.subr.mxu0 0.0
      %157 = vmatpush1.msra.mxu0 0.0
      %158 = vmatprep.subr.mxu0 0.0
      %159 = vmatpush1.msra.mxu0 0.0
      %160 = vmatprep.subr.mxu0 0.0
      %161 = vmatpush1.msra.mxu0 0.0
      %162 = vmatprep.subr.mxu0 0.0
      %163 = vmatpush1.msra.mxu0 0.0
      %164 = vmatprep.subr.mxu0 0.0
      %165 = vmatpush1.msra.mxu0 0.0
      %166 = vmatprep.subr.mxu0 0.0
      %167 = vmatpush1.msra.mxu0 0.0
      %168 = vmatprep.subr.mxu0 0.0
      %169 = vmatpush1.msra.mxu0 0.0
      %170 = vmatprep.subr.mxu0 0.0
      %171 = vmatpush1.msra.mxu0 0.0
      %172 = vmatprep.subr.mxu0 0.0
      %173 = vmatpush1.msra.mxu0 0.0
      %174 = vmatprep.subr.mxu0 0.0
      %175 = vmatpush1.msra.mxu0 0.0
      %176 = vmatprep.subr.mxu0 0.0
      %177 = vmatpush1.msra.mxu0 0.0
      %178 = vmatprep.subr.mxu0 0.0
      %179 = vmatpush1.msra.mxu0 0.0
      %180 = vmatprep.subr.mxu0 0.0
      %181 = vmatpush1.msra.mxu0 0.0
      %182 = vmatprep.subr.mxu0 0.0
      %183 = vmatpush1.msra.mxu0 0.0
      %184 = vmatprep.subr.mxu0 0.0
      %185 = vmatpush1.msra.mxu0 0.0
      %186 = vmatprep.subr.mxu0 0.0
      %187 = vmatpush1.msra.mxu0 0.0
      %188 = vmatprep.subr.mxu0 0.0
      %189 = vmatpush1.msra.mxu0 0.0
      %190 = vmatprep.subr.mxu0 0.0
      %191 = vmatpush1.msra.mxu0 0.0
      %192 = vmatprep.mubr.f32.mxu0 0.0
      %193 = vmatmul.mubr.f32.gmra.mrb[0].mxu0 %v126
      %v194 = vpop.f32.mrb[0].mxu0
      %v195 = vadd.f32 %v122, %v194
      %v196 = vpop.f32.mrb[0].mxu0
      %197 = vdwg.mxu0
      %v198 = vld [vmem:[%s48] sm:$0xff]
      %v199 = vld [vmem:[%s48 + $0x8] sm:$0xff]
      %202 = vrot.lane.b32.xlu0 %v198, 127
      %v203 = vpop.permute.xlu0 %202
      %204 = vrot.lane.b32.xlu0 %v199, 127
      %v205 = vpop.permute.xlu0 %204
      %vm206 = vcmask 1039360
      %v207 = vsel %vm206, %v203, %v205
      %v210 = vsel %vm51, %v28, 0
      %212 = vmatprep.subr.mxu0 0.0
      %213 = vmatpush1.msra.mxu0 %v207
      %214 = vmatprep.subr.mxu0 0.0
      %215 = vmatpush1.msra.mxu0 0.0
      %216 = vmatprep.subr.mxu0 0.0
      %217 = vmatpush1.msra.mxu0 0.0
      %218 = vmatprep.subr.mxu0 0.0
      %219 = vmatpush1.msra.mxu0 0.0
      %220 = vmatprep.subr.mxu0 0.0
      %221 = vmatpush1.msra.mxu0 0.0
      %222 = vmatprep.subr.mxu0 0.0
      %223 = vmatpush1.msra.mxu0 0.0
      %224 = vmatprep.subr.mxu0 0.0
      %225 = vmatpush1.msra.mxu0 0.0
      %226 = vmatprep.subr.mxu0 0.0
      %227 = vmatpush1.msra.mxu0 0.0
      %228 = vmatprep.subr.mxu0 0.0
      %229 = vmatpush1.msra.mxu0 0.0
      %230 = vmatprep.subr.mxu0 0.0
      %231 = vmatpush1.msra.mxu0 0.0
      %232 = vmatprep.subr.mxu0 0.0
      %233 = vmatpush1.msra.mxu0 0.0
      %234 = vmatprep.subr.mxu0 0.0
      %235 = vmatpush1.msra.mxu0 0.0
      %236 = vmatprep.subr.mxu0 0.0
      %237 = vmatpush1.msra.mxu0 0.0
      %238 = vmatprep.subr.mxu0 0.0
      %239 = vmatpush1.msra.mxu0 0.0
      %240 = vmatprep.subr.mxu0 0.0
      %241 = vmatpush1.msra.mxu0 0.0
      %242 = vmatprep.subr.mxu0 0.0
      %243 = vmatpush1.msra.mxu0 0.0
      %244 = vmatprep.subr.mxu0 0.0
      %245 = vmatpush1.msra.mxu0 0.0
      %246 = vmatprep.subr.mxu0 0.0
      %247 = vmatpush1.msra.mxu0 0.0
      %248 = vmatprep.subr.mxu0 0.0
      %249 = vmatpush1.msra.mxu0 0.0
      %250 = vmatprep.subr.mxu0 0.0
      %251 = vmatpush1.msra.mxu0 0.0
      %252 = vmatprep.subr.mxu0 0.0
      %253 = vmatpush1.msra.mxu0 0.0
      %254 = vmatprep.subr.mxu0 0.0
      %255 = vmatpush1.msra.mxu0 0.0
      %256 = vmatprep.subr.mxu0 0.0
      %257 = vmatpush1.msra.mxu0 0.0
      %258 = vmatprep.subr.mxu0 0.0
      %259 = vmatpush1.msra.mxu0 0.0
      %260 = vmatprep.subr.mxu0 0.0
      %261 = vmatpush1.msra.mxu0 0.0
      %262 = vmatprep.subr.mxu0 0.0
      %263 = vmatpush1.msra.mxu0 0.0
      %264 = vmatprep.subr.mxu0 0.0
      %265 = vmatpush1.msra.mxu0 0.0
      %266 = vmatprep.subr.mxu0 0.0
      %267 = vmatpush1.msra.mxu0 0.0
      %268 = vmatprep.subr.mxu0 0.0
      %269 = vmatpush1.msra.mxu0 0.0
      %270 = vmatprep.subr.mxu0 0.0
      %271 = vmatpush1.msra.mxu0 0.0
      %272 = vmatprep.subr.mxu0 0.0
      %273 = vmatpush1.msra.mxu0 0.0
      %274 = vmatprep.subr.mxu0 0.0
      %275 = vmatpush1.msra.mxu0 0.0
      %276 = vmatprep.mubr.f32.mxu0 0.0
      %277 = vmatmul.mubr.f32.gmra.mrb[0].mxu0 %v210
      %v278 = vpop.f32.mrb[0].mxu0
      %v279 = vadd.f32 0.0, %v278
      %v280 = vpop.f32.mrb[0].mxu0
      %281 = vdwg.mxu0
      %v282 = vadd.f32 %v195, %v279
      %284 = vset.pattern.permute.xlu0 0
      %285 = vperm.xlu0 %284, %v35
      %v286 = vpop.permute.xlu0 %285
      %v288 = vadd.f32 %v282, %v286
      %v289 = vmax.f32 %v288, 0.0
      %v290 = vsel %vm39, %v289, 0.0
      %292 = vrot.lane.b32.xlu0 %v290, 1
      %v293 = vpop.permute.xlu0 %292
      %vm295 = vcmask 7168
      %v296 = vsel %vm295, 0.0, %v293
      %v297 = vsel %vm295, %v293, 0.0
      %300 = vrot.lane.b32.xlu0 %v296, 127
      %v301 = vpop.permute.xlu0 %300
      %302 = vrot.lane.b32.xlu0 %v297, 127
      %v303 = vpop.permute.xlu0 %302
      %v304 = vsel %vm206, %v301, %v303
      %v307 = vsel %vm51, %v31, 0
      %309 = vmatprep.subr.mxu0 0.0
      %310 = vmatpush1.msra.mxu0 %v304
      %311 = vmatprep.subr.mxu0 0.0
      %312 = vmatpush1.msra.mxu0 0.0
      %313 = vmatprep.subr.mxu0 0.0
      %314 = vmatpush1.msra.mxu0 0.0
      %315 = vmatprep.subr.mxu0 0.0
      %316 = vmatpush1.msra.mxu0 0.0
      %317 = vmatprep.subr.mxu0 0.0
      %318 = vmatpush1.msra.mxu0 0.0
      %319 = vmatprep.subr.mxu0 0.0
      %320 = vmatpush1.msra.mxu0 0.0
      %321 = vmatprep.subr.mxu0 0.0
      %322 = vmatpush1.msra.mxu0 0.0
      %323 = vmatprep.subr.mxu0 0.0
      %324 = vmatpush1.msra.mxu0 0.0
      %325 = vmatprep.subr.mxu0 0.0
      %326 = vmatpush1.msra.mxu0 0.0
      %327 = vmatprep.subr.mxu0 0.0
      %328 = vmatpush1.msra.mxu0 0.0
      %329 = vmatprep.subr.mxu0 0.0
      %330 = vmatpush1.msra.mxu0 0.0
      %331 = vmatprep.subr.mxu0 0.0
      %332 = vmatpush1.msra.mxu0 0.0
      %333 = vmatprep.subr.mxu0 0.0
      %334 = vmatpush1.msra.mxu0 0.0
      %335 = vmatprep.subr.mxu0 0.0
      %336 = vmatpush1.msra.mxu0 0.0
      %337 = vmatprep.subr.mxu0 0.0
      %338 = vmatpush1.msra.mxu0 0.0
      %339 = vmatprep.subr.mxu0 0.0
      %340 = vmatpush1.msra.mxu0 0.0
      %341 = vmatprep.subr.mxu0 0.0
      %342 = vmatpush1.msra.mxu0 0.0
      %343 = vmatprep.subr.mxu0 0.0
      %344 = vmatpush1.msra.mxu0 0.0
      %345 = vmatprep.subr.mxu0 0.0
      %346 = vmatpush1.msra.mxu0 0.0
      %347 = vmatprep.subr.mxu0 0.0
      %348 = vmatpush1.msra.mxu0 0.0
      %349 = vmatprep.subr.mxu0 0.0
      %350 = vmatpush1.msra.mxu0 0.0
      %351 = vmatprep.subr.mxu0 0.0
      %352 = vmatpush1.msra.mxu0 0.0
      %353 = vmatprep.subr.mxu0 0.0
      %354 = vmatpush1.msra.mxu0 0.0
      %355 = vmatprep.subr.mxu0 0.0
      %356 = vmatpush1.msra.mxu0 0.0
      %357 = vmatprep.subr.mxu0 0.0
      %358 = vmatpush1.msra.mxu0 0.0
      %359 = vmatprep.subr.mxu0 0.0
      %360 = vmatpush1.msra.mxu0 0.0
      %361 = vmatprep.subr.mxu0 0.0
      %362 = vmatpush1.msra.mxu0 0.0
      %363 = vmatprep.subr.mxu0 0.0
      %364 = vmatpush1.msra.mxu0 0.0
      %365 = vmatprep.subr.mxu0 0.0
      %366 = vmatpush1.msra.mxu0 0.0
      %367 = vmatprep.subr.mxu0 0.0
      %368 = vmatpush1.msra.mxu0 0.0
      %369 = vmatprep.subr.mxu0 0.0
      %370 = vmatpush1.msra.mxu0 0.0
      %371 = vmatprep.subr.mxu0 0.0
      %372 = vmatpush1.msra.mxu0 0.0
      %373 = vmatprep.mubr.f32.mxu0 0.0
      %374 = vmatmul.mubr.f32.gmra.mrb[0].mxu0 %v307
      %v375 = vpop.f32.mrb[0].mxu0
      %v376 = vadd.f32 0.0, %v375
      %v377 = vpop.f32.mrb[0].mxu0
      %378 = vdwg.mxu0
      %v380 = vsel %vm51, %v29, 0
      %382 = vmatprep.subr.mxu0 0.0
      %383 = vmatpush1.msra.mxu0 %v296
      %384 = vmatprep.subr.mxu0 0.0
      %385 = vmatpush1.msra.mxu0 0.0
      %386 = vmatprep.subr.mxu0 0.0
      %387 = vmatpush1.msra.mxu0 0.0
      %388 = vmatprep.subr.mxu0 0.0
      %389 = vmatpush1.msra.mxu0 0.0
      %390 = vmatprep.subr.mxu0 0.0
      %391 = vmatpush1.msra.mxu0 0.0
      %392 = vmatprep.subr.mxu0 0.0
      %393 = vmatpush1.msra.mxu0 0.0
      %394 = vmatprep.subr.mxu0 0.0
      %395 = vmatpush1.msra.mxu0 0.0
      %396 = vmatprep.subr.mxu0 0.0
      %397 = vmatpush1.msra.mxu0 0.0
      %398 = vmatprep.subr.mxu0 0.0
      %399 = vmatpush1.msra.mxu0 0.0
      %400 = vmatprep.subr.mxu0 0.0
      %401 = vmatpush1.msra.mxu0 0.0
      %402 = vmatprep.subr.mxu0 0.0
      %403 = vmatpush1.msra.mxu0 0.0
      %404 = vmatprep.subr.mxu0 0.0
      %405 = vmatpush1.msra.mxu0 0.0
      %406 = vmatprep.subr.mxu0 0.0
      %407 = vmatpush1.msra.mxu0 0.0
      %408 = vmatprep.subr.mxu0 0.0
      %409 = vmatpush1.msra.mxu0 0.0
      %410 = vmatprep.subr.mxu0 0.0
      %411 = vmatpush1.msra.mxu0 0.0
      %412 = vmatprep.subr.mxu0 0.0
      %413 = vmatpush1.msra.mxu0 0.0
      %414 = vmatprep.subr.mxu0 0.0
      %415 = vmatpush1.msra.mxu0 0.0
      %416 = vmatprep.subr.mxu0 0.0
      %417 = vmatpush1.msra.mxu0 0.0
      %418 = vmatprep.subr.mxu0 0.0
      %419 = vmatpush1.msra.mxu0 0.0
      %420 = vmatprep.subr.mxu0 0.0
      %421 = vmatpush1.msra.mxu0 0.0
      %422 = vmatprep.subr.mxu0 0.0
      %423 = vmatpush1.msra.mxu0 0.0
      %424 = vmatprep.subr.mxu0 0.0
      %425 = vmatpush1.msra.mxu0 0.0
      %426 = vmatprep.subr.mxu0 0.0
      %427 = vmatpush1.msra.mxu0 0.0
      %428 = vmatprep.subr.mxu0 0.0
      %429 = vmatpush1.msra.mxu0 0.0
      %430 = vmatprep.subr.mxu0 0.0
      %431 = vmatpush1.msra.mxu0 0.0
      %432 = vmatprep.subr.mxu0 0.0
      %433 = vmatpush1.msra.mxu0 0.0
      %434 = vmatprep.subr.mxu0 0.0
      %435 = vmatpush1.msra.mxu0 0.0
      %436 = vmatprep.subr.mxu0 0.0
      %437 = vmatpush1.msra.mxu0 0.0
      %438 = vmatprep.subr.mxu0 0.0
      %439 = vmatpush1.msra.mxu0 0.0
      %440 = vmatprep.subr.mxu0 0.0
      %441 = vmatpush1.msra.mxu0 0.0
      %442 = vmatprep.subr.mxu0 0.0
      %443 = vmatpush1.msra.mxu0 0.0
      %444 = vmatprep.subr.mxu0 0.0
      %445 = vmatpush1.msra.mxu0 0.0
      %446 = vmatprep.mubr.f32.mxu0 0.0
      %447 = vmatmul.mubr.f32.gmra.mrb[0].mxu0 %v380
      %v448 = vpop.f32.mrb[0].mxu0
      %v449 = vadd.f32 %v376, %v448
      %v450 = vpop.f32.mrb[0].mxu0
      %451 = vdwg.mxu0
      %452 = vrot.lane.b32.xlu0 %v296, 126
      %v453 = vpop.permute.xlu0 %452
      %454 = vrot.lane.b32.xlu0 %v297, 126
      %v455 = vpop.permute.xlu0 %454
      %vm456 = vcmask 1031168
      %v457 = vsel %vm456, %v453, %v455
      %v460 = vsel %vm51, %v33, 0
      %462 = vmatprep.subr.mxu0 0.0
      %463 = vmatpush1.msra.mxu0 %v457
      %464 = vmatprep.subr.mxu0 0.0
      %465 = vmatpush1.msra.mxu0 0.0
      %466 = vmatprep.subr.mxu0 0.0
      %467 = vmatpush1.msra.mxu0 0.0
      %468 = vmatprep.subr.mxu0 0.0
      %469 = vmatpush1.msra.mxu0 0.0
      %470 = vmatprep.subr.mxu0 0.0
      %471 = vmatpush1.msra.mxu0 0.0
      %472 = vmatprep.subr.mxu0 0.0
      %473 = vmatpush1.msra.mxu0 0.0
      %474 = vmatprep.subr.mxu0 0.0
      %475 = vmatpush1.msra.mxu0 0.0
      %476 = vmatprep.subr.mxu0 0.0
      %477 = vmatpush1.msra.mxu0 0.0
      %478 = vmatprep.subr.mxu0 0.0
      %479 = vmatpush1.msra.mxu0 0.0
      %480 = vmatprep.subr.mxu0 0.0
      %481 = vmatpush1.msra.mxu0 0.0
      %482 = vmatprep.subr.mxu0 0.0
      %483 = vmatpush1.msra.mxu0 0.0
      %484 = vmatprep.subr.mxu0 0.0
      %485 = vmatpush1.msra.mxu0 0.0
      %486 = vmatprep.subr.mxu0 0.0
      %487 = vmatpush1.msra.mxu0 0.0
      %488 = vmatprep.subr.mxu0 0.0
      %489 = vmatpush1.msra.mxu0 0.0
      %490 = vmatprep.subr.mxu0 0.0
      %491 = vmatpush1.msra.mxu0 0.0
      %492 = vmatprep.subr.mxu0 0.0
      %493 = vmatpush1.msra.mxu0 0.0
      %494 = vmatprep.subr.mxu0 0.0
      %495 = vmatpush1.msra.mxu0 0.0
      %496 = vmatprep.subr.mxu0 0.0
      %497 = vmatpush1.msra.mxu0 0.0
      %498 = vmatprep.subr.mxu0 0.0
      %499 = vmatpush1.msra.mxu0 0.0
      %500 = vmatprep.subr.mxu0 0.0
      %501 = vmatpush1.msra.mxu0 0.0
      %502 = vmatprep.subr.mxu0 0.0
      %503 = vmatpush1.msra.mxu0 0.0
      %504 = vmatprep.subr.mxu0 0.0
      %505 = vmatpush1.msra.mxu0 0.0
      %506 = vmatprep.subr.mxu0 0.0
      %507 = vmatpush1.msra.mxu0 0.0
      %508 = vmatprep.subr.mxu0 0.0
      %509 = vmatpush1.msra.mxu0 0.0
      %510 = vmatprep.subr.mxu0 0.0
      %511 = vmatpush1.msra.mxu0 0.0
      %512 = vmatprep.subr.mxu0 0.0
      %513 = vmatpush1.msra.mxu0 0.0
      %514 = vmatprep.subr.mxu0 0.0
      %515 = vmatpush1.msra.mxu0 0.0
      %516 = vmatprep.subr.mxu0 0.0
      %517 = vmatpush1.msra.mxu0 0.0
      %518 = vmatprep.subr.mxu0 0.0
      %519 = vmatpush1.msra.mxu0 0.0
      %520 = vmatprep.subr.mxu0 0.0
      %521 = vmatpush1.msra.mxu0 0.0
      %522 = vmatprep.subr.mxu0 0.0
      %523 = vmatpush1.msra.mxu0 0.0
      %524 = vmatprep.subr.mxu0 0.0
      %525 = vmatpush1.msra.mxu0 0.0
      %526 = vmatprep.mubr.f32.mxu0 0.0
      %527 = vmatmul.mubr.f32.gmra.mrb[0].mxu0 %v460
      %v528 = vpop.f32.mrb[0].mxu0
      %v529 = vadd.f32 0.0, %v528
      %v530 = vpop.f32.mrb[0].mxu0
      %531 = vdwg.mxu0
      %v532 = vadd.f32 %v449, %v529
      %v534 = vsel %vm51, %v34, 0
      %536 = vmatprep.subr.mxu0 0.0
      %537 = vmatpush1.msra.mxu0 %v50
      %538 = vmatprep.subr.mxu0 0.0
      %539 = vmatpush1.msra.mxu0 0.0
      %540 = vmatprep.subr.mxu0 0.0
      %541 = vmatpush1.msra.mxu0 0.0
      %542 = vmatprep.subr.mxu0 0.0
      %543 = vmatpush1.msra.mxu0 0.0
      %544 = vmatprep.subr.mxu0 0.0
      %545 = vmatpush1.msra.mxu0 0.0
      %546 = vmatprep.subr.mxu0 0.0
      %547 = vmatpush1.msra.mxu0 0.0
      %548 = vmatprep.subr.mxu0 0.0
      %549 = vmatpush1.msra.mxu0 0.0
      %550 = vmatprep.subr.mxu0 0.0
      %551 = vmatpush1.msra.mxu0 0.0
      %552 = vmatprep.subr.mxu0 0.0
      %553 = vmatpush1.msra.mxu0 0.0
      %554 = vmatprep.subr.mxu0 0.0
      %555 = vmatpush1.msra.mxu0 0.0
      %556 = vmatprep.subr.mxu0 0.0
      %557 = vmatpush1.msra.mxu0 0.0
      %558 = vmatprep.subr.mxu0 0.0
      %559 = vmatpush1.msra.mxu0 0.0
      %560 = vmatprep.subr.mxu0 0.0
      %561 = vmatpush1.msra.mxu0 0.0
      %562 = vmatprep.subr.mxu0 0.0
      %563 = vmatpush1.msra.mxu0 0.0
      %564 = vmatprep.subr.mxu0 0.0
      %565 = vmatpush1.msra.mxu0 0.0
      %566 = vmatprep.subr.mxu0 0.0
      %567 = vmatpush1.msra.mxu0 0.0
      %568 = vmatprep.subr.mxu0 0.0
      %569 = vmatpush1.msra.mxu0 0.0
      %570 = vmatprep.subr.mxu0 0.0
      %571 = vmatpush1.msra.mxu0 0.0
      %572 = vmatprep.subr.mxu0 0.0
      %573 = vmatpush1.msra.mxu0 0.0
      %574 = vmatprep.subr.mxu0 0.0
      %575 = vmatpush1.msra.mxu0 0.0
      %576 = vmatprep.subr.mxu0 0.0
      %577 = vmatpush1.msra.mxu0 0.0
      %578 = vmatprep.subr.mxu0 0.0
      %579 = vmatpush1.msra.mxu0 0.0
      %580 = vmatprep.subr.mxu0 0.0
      %581 = vmatpush1.msra.mxu0 0.0
      %582 = vmatprep.subr.mxu0 0.0
      %583 = vmatpush1.msra.mxu0 0.0
      %584 = vmatprep.subr.mxu0 0.0
      %585 = vmatpush1.msra.mxu0 0.0
      %586 = vmatprep.subr.mxu0 0.0
      %587 = vmatpush1.msra.mxu0 0.0
      %588 = vmatprep.subr.mxu0 0.0
      %589 = vmatpush1.msra.mxu0 0.0
      %590 = vmatprep.subr.mxu0 0.0
      %591 = vmatpush1.msra.mxu0 0.0
      %592 = vmatprep.subr.mxu0 0.0
      %593 = vmatpush1.msra.mxu0 0.0
      %594 = vmatprep.subr.mxu0 0.0
      %595 = vmatpush1.msra.mxu0 0.0
      %596 = vmatprep.subr.mxu0 0.0
      %597 = vmatpush1.msra.mxu0 0.0
      %598 = vmatprep.subr.mxu0 0.0
      %599 = vmatpush1.msra.mxu0 0.0
      %600 = vmatprep.mubr.f32.mxu0 0.0
      %601 = vmatmul.mubr.f32.gmra.mrb[0].mxu0 %v534
      %v602 = vpop.f32.mrb[0].mxu0
      %v603 = vadd.f32 0.0, %v602
      %v604 = vpop.f32.mrb[0].mxu0
      %605 = vdwg.mxu0
      %v606 = vadd.f32 %v532, %v603
      %608 = vset.pattern.permute.xlu0 0
      %609 = vperm.xlu0 %608, %v36
      %v610 = vpop.permute.xlu0 %609
      %v612 = vadd.f32 %v606, %v610
      %v613 = vtanh.pop %v612
      %s614 = smul.u32 %s41, 8
      %s615 = scalar_lea.vmem [#allocation2], %s614
      %616 = vst [vmem:[%s615] sm:$0xff] %v613
    $region30: #{residual_block_pallas.1} parent=1 // loop_footer
      %s45 = sadd.s32 1, %s41
    $region31: #{residual_block_pallas.1} parent=1 // loop_footer_branch
      %40 = sbr.rel target = $region27
    $region32: #{residual_block_pallas.1} parent=1 // loop_exit
      _
    // Predicated region
    $region33: #{residual_block_pallas.1} parent=1 // pred_check
      _
    $region34: #{residual_block_pallas.1} parent=1 // pred_check_branch
      %618 = sbr.rel (0) target = $region36
    $region35: #{residual_block_pallas.1} parent=1 // pred_region
      %s620 = ssub.s32 256, 256
      %621 = vsyncadd [#allocation3], %s620
      %s622 = sshll.u32 [#allocation2], 4
      %s623 = int_to_ptr.vmem [resolvable:$true] %s622
      %628 = dma.vmem_to_hbm [thread:$0]  %s623, 256, %s6, [#allocation3], 128, 128, 8
    $region36: #{residual_block_pallas.1} parent=1 // pred_fallthru
      _
    // Predicated region
    $region37: #{residual_block_pallas.1} parent=1 // pred_check
      _
    $region38: #{residual_block_pallas.1} parent=1 // pred_check_branch
      %630 = sbr.rel (0) target = $region40
    $region39: #{residual_block_pallas.1} parent=1 // pred_region
      %631 = dma.done [#allocation3], 256
    $region40: #{residual_block_pallas.1} parent=1 // pred_fallthru
      _
    %632 = vsyncpa [#allocation3], 1

</llo_original>
